<compile_context>
chip_gen: v6e
topology: v6e:2x2x1
jax: 0.10.0
libtpu: 0.0.40
codegen_flags: <defaults>
</compile_context>

<pallas_src>
import jax
import jax.numpy as jnp
from jax import lax
from jax.experimental import pallas as pl
from jax.experimental.pallas import tpu as pltpu

AIR_CURRENT = 0.05
BOOST_ACCEL = 0.2
DRAG_CON = 0.05
FRAME_TIME = 0.1
GRAVITY_ACCEL = 0.12

_ROWS, _LANES = 8, 128  # one f32 vreg per tile

# step_mat exactly as in the PyTorch module (only used by the pure-JAX reference).
STEP_MAT = jnp.array(
    [[1.0, 0.0, 0.0, 0.0, 0.0, 0.0],
     [FRAME_TIME, 1.0, 0.0, 0.0, 0.0, 0.0],
     [0.0, 0.0, 1.0, 0.0, 0.0, 0.0],
     [0.0, 0.0, FRAME_TIME, 1.0, 0.0, 0.0],
     [0.0, 0.0, 0.0, 0.0, 1.0, 0.0],
     [0.0, 0.0, 0.0, 0.0, FRAME_TIME, 1.0]],
    dtype=jnp.float32,
)


def _make_rollout_kernel(num_steps: int):
    bdt = BOOST_ACCEL * FRAME_TIME
    neg_gd = -(GRAVITY_ACCEL + DRAG_CON) * FRAME_TIME
    air = AIR_CURRENT * FRAME_TIME

    def kernel(actions_ref, sv_ref, out_ref):
        # actions_ref: SMEM f32[3 * num_steps]
        # sv_ref/out_ref: VMEM f32[2, 8, 128]; slot 0 = pos tile, slot 1 = vel tile
        # (x, y, z live in lanes 0..2 of row 0 of each slot).
        col = lax.broadcasted_iota(jnp.int32, (_ROWS, _LANES), 1)
        is_x = col == 0
        is_y = col == 1
        is_z = col == 2
        # Air current acts on the x position; constant across steps (hoisted).
        dpos = jnp.where(is_x, air, 0.0)

        def step(t, carry):
            pos, vel = carry
            a0 = actions_ref[3 * t]
            a1 = actions_ref[3 * t + 1]
            a2 = actions_ref[3 * t + 2]
            # Scalar-unit math first; one select tree builds the vel update.
            dvel = jnp.where(
                is_x, -bdt * a0,
                jnp.where(is_y, bdt * a1 + neg_gd,
                          jnp.where(is_z, bdt * a2, 0.0)))
            pos = pos + dpos
            vel = vel + dvel
            pos = pos + FRAME_TIME * vel   # == state @ step_mat (pos += dt * vel)
            return pos, vel

        pos = sv_ref[0]
        vel = sv_ref[1]
        if num_steps <= 16:
            # Fully static unroll for short horizons (static SMEM indices).
            for t in range(num_steps):
                pos, vel = step(t, (pos, vel))
        else:
            pos, vel = lax.fori_loop(0, num_steps, step, (pos, vel))
        out_ref[0] = pos
        out_ref[1] = vel

    return kernel


def _rollout_call(actions_flat, sv_pad, num_steps):
    return pl.pallas_call(
        _make_rollout_kernel(num_steps),
        out_shape=jax.ShapeDtypeStruct((2, _ROWS, _LANES), jnp.float32),
        in_specs=[
            pl.BlockSpec(memory_space=pltpu.MemorySpace.SMEM),  # actions (scalars)
            pl.BlockSpec(memory_space=pltpu.MemorySpace.VMEM),  # state tiles
        ],
        out_specs=pl.BlockSpec(memory_space=pltpu.MemorySpace.VMEM),
        input_output_aliases={1: 0},  # update the state tile in place
    )(actions_flat, sv_pad)


@jax.jit
def dynamics_rollout(state, actions):
    """state: f32[6], actions: f32[T, 3] -> f32[6] after T dynamics steps."""
    state = state.astype(jnp.float32)
    actions = actions.astype(jnp.float32)
    num_steps = actions.shape[0]

    sv = jnp.zeros((2, _ROWS, _LANES), jnp.float32)
    sv = sv.at[0, 0, :3].set(state[0::2])   # positions  x, y, z
    sv = sv.at[1, 0, :3].set(state[1::2])   # velocities x_dot, y_dot, z_dot

    out = _rollout_call(actions.reshape(-1), sv, num_steps)
    # Re-interleave to [x, x_dot, y, y_dot, z, z_dot].
    return jnp.stack([out[0, 0, :3], out[1, 0, :3]], axis=-1).reshape(6)


def dynamics_forward(state, action):
    """Single step; matches PyTorch Dynamics.forward(state, action)."""
    return dynamics_rollout(state, jnp.reshape(action, (1, 3)))


def dynamics_ref(state, action):
    """Pure-JAX reference reproducing the PyTorch forward exactly."""
    dstate_grav = jnp.array([0.0, 0.0, 0.0, -GRAVITY_ACCEL * FRAME_TIME, 0.0, 0.0], jnp.float32)
    dstate_drag = jnp.array([0.0, 0.0, 0.0, -DRAG_CON * FRAME_TIME, 0.0, 0.0], jnp.float32)
    dstate_thrust_y = BOOST_ACCEL * FRAME_TIME * jnp.array([0.0, -1.0, 0.0, 0.0, 0.0, 0.0]) * action[0]
    dstate_thrust_x = BOOST_ACCEL * FRAME_TIME * jnp.array([0.0, 0.0, 0.0, 1.0, 0.0, 0.0]) * action[1]
    dstate_thrust_z = BOOST_ACCEL * FRAME_TIME * jnp.array([0.0, 0.0, 0.0, 0.0, 0.0, 1.0]) * action[2]
    dstate_trust = dstate_thrust_y + dstate_thrust_x + dstate_thrust_z
    dstate_ac = jnp.array([AIR_CURRENT * FRAME_TIME, 0.0, 0.0, 0.0, 0.0, 0.0], jnp.float32)
    dstate = dstate_trust + dstate_drag + dstate_grav + dstate_ac
    state = state + dstate
    return jnp.matmul(state, STEP_MAT)


if __name__ == "__main__":
    key = jax.random.PRNGKey(0)
    k_state, k_action = jax.random.split(key)
    state = jax.random.normal(k_state, (6,), dtype=jnp.float32)
    actions = jax.random.uniform(k_action, (8, 3), dtype=jnp.float32)

    # Single step: identical semantics to the PyTorch module's forward().
    out1 = jax.block_until_ready(dynamics_forward(state, actions[0]))
    exp1 = dynamics_ref(state, actions[0])
    assert out1.shape == (6,) and out1.dtype == jnp.float32
    assert jnp.allclose(out1, exp1, atol=1e-5, rtol=1e-5)

    # Fused 8-step rollout inside one pallas_call (state resident in vregs).
    outT = jax.block_until_ready(dynamics_rollout(state, actions))
    expT = state
    for i in range(actions.shape[0]):
        expT = dynamics_ref(expT, actions[i])
    assert outT.shape == (6,) and outT.dtype == jnp.float32
    assert jnp.allclose(outT, expT, atol=1e-5, rtol=1e-5)

    print("KERNEL_OK")
</pallas_src>

<mosaic_0001>
module attributes {stable_mosaic.version = 11 : i64} {
  func.func @kernel(%arg0: memref<3xf32, #tpu.memory_space<smem>>, %arg1: memref<2x8x128xf32, #tpu.memory_space<vmem>>, %arg2: memref<2x8x128xf32, #tpu.memory_space<vmem>>) attributes {dimension_semantics = [], scalar_prefetch = 0 : i64, scratch_operands = 0 : i64, tpu.core_type = #tpu.core_type<tc>} {
    %0 = tpu.iota {dimensions = array<i32: 1>} : vector<8x128xi32>
    %c0_i32 = arith.constant 0 : i32
    %1 = vector.broadcast %c0_i32 : i32 to vector<8x128xi32>
    %2 = arith.cmpi eq, %0, %1 : vector<8x128xi32>
    %c1_i32 = arith.constant 1 : i32
    %3 = vector.broadcast %c1_i32 : i32 to vector<8x128xi32>
    %4 = arith.cmpi eq, %0, %3 : vector<8x128xi32>
    %c2_i32 = arith.constant 2 : i32
    %5 = vector.broadcast %c2_i32 : i32 to vector<8x128xi32>
    %6 = arith.cmpi eq, %0, %5 : vector<8x128xi32>
    %cst = arith.constant 5.000000e-03 : f32
    %cst_0 = arith.constant 0.000000e+00 : f32
    %7 = vector.broadcast %cst : f32 to vector<8x128xf32>
    %8 = vector.broadcast %cst_0 : f32 to vector<8x128xf32>
    %9 = arith.select %2, %7, %8 : vector<8x128xi1>, vector<8x128xf32>
    %c0 = arith.constant 0 : index
    %c0_1 = arith.constant 0 : index
    %c0_2 = arith.constant 0 : index
    %10 = vector.load %arg1[%c0, %c0_1, %c0_2] : memref<2x8x128xf32, #tpu.memory_space<vmem>>, vector<1x8x128xf32>
    %11 = vector.shape_cast %10 : vector<1x8x128xf32> to vector<8x128xf32>
    %c1 = arith.constant 1 : index
    %c0_3 = arith.constant 0 : index
    %c0_4 = arith.constant 0 : index
    %12 = vector.load %arg1[%c1, %c0_3, %c0_4] : memref<2x8x128xf32, #tpu.memory_space<vmem>>, vector<1x8x128xf32>
    %13 = vector.shape_cast %12 : vector<1x8x128xf32> to vector<8x128xf32>
    %c0_5 = arith.constant 0 : index
    %14 = memref.load %arg0[%c0_5] : memref<3xf32, #tpu.memory_space<smem>>
    %c1_6 = arith.constant 1 : index
    %15 = memref.load %arg0[%c1_6] : memref<3xf32, #tpu.memory_space<smem>>
    %c2 = arith.constant 2 : index
    %16 = memref.load %arg0[%c2] : memref<3xf32, #tpu.memory_space<smem>>
    %cst_7 = arith.constant -2.000000e-02 : f32
    %17 = arith.mulf %cst_7, %14 : f32
    %cst_8 = arith.constant 2.000000e-02 : f32
    %18 = arith.mulf %cst_8, %15 : f32
    %cst_9 = arith.constant -1.700000e-02 : f32
    %19 = arith.addf %18, %cst_9 : f32
    %cst_10 = arith.constant 2.000000e-02 : f32
    %20 = arith.mulf %cst_10, %16 : f32
    %cst_11 = arith.constant 0.000000e+00 : f32
    %21 = vector.broadcast %20 : f32 to vector<8x128xf32>
    %22 = vector.broadcast %cst_11 : f32 to vector<8x128xf32>
    %23 = arith.select %6, %21, %22 : vector<8x128xi1>, vector<8x128xf32>
    %24 = vector.broadcast %19 : f32 to vector<8x128xf32>
    %25 = arith.select %4, %24, %23 : vector<8x128xi1>, vector<8x128xf32>
    %26 = vector.broadcast %17 : f32 to vector<8x128xf32>
    %27 = arith.select %2, %26, %25 : vector<8x128xi1>, vector<8x128xf32>
    %28 = arith.addf %11, %9 : vector<8x128xf32>
    %29 = arith.addf %13, %27 : vector<8x128xf32>
    %cst_12 = arith.constant 1.000000e-01 : f32
    %30 = vector.broadcast %cst_12 : f32 to vector<8x128xf32>
    %31 = arith.mulf %30, %29 : vector<8x128xf32>
    %32 = arith.addf %28, %31 : vector<8x128xf32>
    %c0_13 = arith.constant 0 : index
    %c0_14 = arith.constant 0 : index
    %c0_15 = arith.constant 0 : index
    %33 = vector.load %arg2[%c0_13, %c0_14, %c0_15] : memref<2x8x128xf32, #tpu.memory_space<vmem>>, vector<1x8x128xf32>
    %34 = vector.shape_cast %33 : vector<1x8x128xf32> to vector<8x128xf32>
    %35 = vector.shape_cast %32 : vector<8x128xf32> to vector<1x8x128xf32>
    tpu.vector_store %arg2[%c0_13, %c0_14, %c0_15], %35 {strides = array<i32>} : memref<2x8x128xf32, #tpu.memory_space<vmem>>, vector<1x8x128xf32>,
    %c1_16 = arith.constant 1 : index
    %c0_17 = arith.constant 0 : index
    %c0_18 = arith.constant 0 : index
    %36 = vector.load %arg2[%c1_16, %c0_17, %c0_18] : memref<2x8x128xf32, #tpu.memory_space<vmem>>, vector<1x8x128xf32>
    %37 = vector.shape_cast %36 : vector<1x8x128xf32> to vector<8x128xf32>
    %38 = vector.shape_cast %29 : vector<8x128xf32> to vector<1x8x128xf32>
    tpu.vector_store %arg2[%c1_16, %c0_17, %c0_18], %38 {strides = array<i32>} : memref<2x8x128xf32, #tpu.memory_space<vmem>>, vector<1x8x128xf32>,
    return
  }
}

</mosaic_0001>

<llo_original>
// kernel: dynamics_rollout.1
$region0: #{dynamics_rollout.1}
  #allocation0 [shape = 'u32[]', space=smem, size = 0x4, offset = 0x4, fixed_abs, tag = 'smem constant byte address 0x4 - core index']
  #allocation1 [shape = 'u32[144,128]{1,0:T(1,128)}', space=vmem, size = 0x12000, scoped, tag = 'internal scratch']
  %s0 = inlined_call_operand.vmem [shape: f32[3], index: 0, kind: input, shape index: {}]
  %s1 = inlined_call_operand.vmem [shape: f32[2,8,128], index: 1, kind: input, shape index: {}, may-alias: {1,2}]
  %s2 = inlined_call_operand.vmem [shape: f32[2,8,128], index: 2, kind: output, shape index: {}, may-alias: {1,2}]
  %s3 = sld [smem:[#allocation0]]
  $region22: #{dynamics_rollout.1} parent=0
    _
  %s5 = ssub.s32 1, %s3
  %s6 = scalar_select 0, %s5, %s3
  $region1: #{dynamics_rollout.1} parent=0
    #allocation2 [shape = 'u8[512]{0}', space=smem, size = 0x200, scoped, tag = 'input window, operand 0, single buffered']
    #allocation3 [shape = 's32[1]{0}', space=sflag, size = 0x4, scoped, tag = 'scoped memory for dynamics_rollout.1']
    %7 = vsyncpa [#allocation3], 0
    // Predicated region
    $region2: #{dynamics_rollout.1} parent=1 // pred_check
      _
    $region3: #{dynamics_rollout.1} parent=1 // pred_check_branch
      %9 = sbr.rel (0) target = $region5
    $region4: #{dynamics_rollout.1} parent=1 // pred_region
      %s11 = ssub.s32 16, 16
      %12 = vsyncadd [#allocation3], %s11
      %s14 = sshll.u32 %s0, 4
      %s15 = int_to_ptr.vmem [resolvable:$true] %s14
      %17 = dma.vmem_to_smem %s15, 16, [#allocation2], [#allocation3]
    $region5: #{dynamics_rollout.1} parent=1 // pred_fallthru
      _
    // Predicated region
    $region6: #{dynamics_rollout.1} parent=1 // pred_check
      _
    $region7: #{dynamics_rollout.1} parent=1 // pred_check_branch
      %19 = sbr.rel (0) target = $region9
    $region8: #{dynamics_rollout.1} parent=1 // pred_region
      _
    $region9: #{dynamics_rollout.1} parent=1 // pred_fallthru
      _
    // Predicated region
    $region10: #{dynamics_rollout.1} parent=1 // pred_check
      _
    $region11: #{dynamics_rollout.1} parent=1 // pred_check_branch
      %21 = sbr.rel (0) target = $region13
    $region12: #{dynamics_rollout.1} parent=1 // pred_region
      %22 = dma.done [#allocation3], 16
    $region13: #{dynamics_rollout.1} parent=1 // pred_fallthru
      _
    %23 = sfence
    %v24 = vlaneseq
    %v25 = vand.u32 %v24, 127
    %vm26 = vcmp.eq.s32.totalorder %v25, 0
    %vm27 = vcmp.eq.s32.totalorder %v25, 1
    %vm28 = vcmp.eq.s32.totalorder %v25, 2
    %v29 = vsel %vm26, 0.005, 0.0
    %v30 = vld [vmem:[%s1] sm:$0xff]
    %s31 = scalar_lea.vmem %s1, 8
    %v32 = vld [vmem:[%s31] sm:$0xff]
    %s33 = sld [smem:[#allocation2]]
    %s34 = sld [smem:[#allocation2 + $0x1]]
    %s35 = sld [smem:[#allocation2 + $0x2]]
    %s36 = smul.f32 %s33, -0.02
    %s37 = smul.f32 %s34, 0.02
    %s38 = sadd.f32 %s37, -0.017
    %s39 = smul.f32 %s35, 0.02
    %v40 = vstv %s39
    %v41 = vsel %vm28, %v40, 0.0
    %v42 = vstv %s38
    %v43 = vsel %vm27, %v42, %v41
    %v44 = vstv %s36
    %v45 = vsel %vm26, %v44, %v43
    %v46 = vadd.f32 %v30, %v29
    %v47 = vadd.f32 %v32, %v45
    %v48 = vmul.f32 %v47, 0.1
    %v49 = vadd.f32 %v46, %v48
    %50 = vst [vmem:[%s2] sm:$0xff] %v49
    %s51 = scalar_lea.vmem %s2, 8
    %52 = vst [vmem:[%s51] sm:$0xff] %v47
    // Predicated region
    $region14: #{dynamics_rollout.1} parent=1 // pred_check
      _
    $region15: #{dynamics_rollout.1} parent=1 // pred_check_branch
      %54 = sbr.rel (0) target = $region17
    $region16: #{dynamics_rollout.1} parent=1 // pred_region
      _
    $region17: #{dynamics_rollout.1} parent=1 // pred_fallthru
      _
    // Predicated region
    $region18: #{dynamics_rollout.1} parent=1 // pred_check
      _
    $region19: #{dynamics_rollout.1} parent=1 // pred_check_branch
      %56 = sbr.rel (0) target = $region21
    $region20: #{dynamics_rollout.1} parent=1 // pred_region
      _
    $region21: #{dynamics_rollout.1} parent=1 // pred_fallthru
      _
    %57 = vsyncpa [#allocation3], 1

</llo_original>
